<compile_context>
chip_gen: v7x
topology: tpu7x:2x2x1
jax: 0.10.0
libtpu: 0.0.40
codegen_flags: <defaults>
</compile_context>

<pallas_src>
import jax
import jax.numpy as jnp
from jax.experimental import pallas as pl
from jax.experimental.pallas import tpu as pltpu


def _square_kernel(var_ref, out_ref):
    # Elementwise hot path: pow(var, 2) == var * var, on the VPU.
    v = var_ref[...]
    out_ref[...] = v * v


# Per-block footprint cap. With default double buffering the pipeline holds
# ~4x this (input + output, 2 buffers each) -> 24 MiB, which fits every
# generation's scoped VMEM with headroom (v7x: 64 MiB physical).
_MAX_BLOCK_BYTES = 6 * 1024 * 1024


def _sublane_multiple(dtype) -> int:
    # f32 -> 8 rows, bf16/f16 -> 16, int8/fp8 -> 32 (sub-32-bit packs sublanes).
    return max(8, 32 // jnp.dtype(dtype).itemsize)


def one_var_forward(var: jax.Array) -> jax.Array:
    """Pallas implementation of OneVarModule.forward() -> var ** 2."""
    orig_shape = var.shape

    # Flatten to 2-D [rows, lanes]; keep the trailing dim lane-dense and never
    # tile it (only the row axis is blocked).
    if var.ndim == 0:
        x = var.reshape(1, 1)
    elif var.ndim == 1:
        x = var.reshape(1, -1)
    else:
        x = var.reshape(-1, orig_shape[-1])

    R, C = x.shape
    itemsize = jnp.dtype(x.dtype).itemsize
    sub = _sublane_multiple(x.dtype)

    # Largest row-block (multiple of the sublane packing) within the budget.
    max_rows = max(sub, (_MAX_BLOCK_BYTES // (C * itemsize)) // sub * sub)

    if R <= max_rows:
        # Whole array in a single block: exactly one DMA in / compute / DMA out.
        block_rows = R
    else:
        # Biggest tile that fits; pl.cdiv masks the ragged last block.
        block_rows = max_rows

    grid = (pl.cdiv(R, block_rows),)

    out2d = pl.pallas_call(
        _square_kernel,
        out_shape=jax.ShapeDtypeStruct((R, C), x.dtype),
        grid_spec=pltpu.PrefetchScalarGridSpec(
            num_scalar_prefetch=0,
            grid=grid,
            in_specs=[pl.BlockSpec((block_rows, C), lambda i: (i, 0))],
            out_specs=pl.BlockSpec((block_rows, C), lambda i: (i, 0)),
        ),
        compiler_params=pltpu.CompilerParams(
            dimension_semantics=("parallel",),
            vmem_limit_bytes=64 << 20,
        ),
    )(x)

    return out2d.reshape(orig_shape)


if __name__ == "__main__":
    # Deterministic "parameter" initialization (stands in for param_value).
    key = jax.random.PRNGKey(0)
    var = jax.random.normal(key, (32, 128), dtype=jnp.float32)

    out = one_var_forward(var)
    out = jax.block_until_ready(out)

    # Correctness check against the obvious reference.
    ref = var * var
    assert out.shape == var.shape and out.dtype == var.dtype
    assert jnp.allclose(out, ref, atol=1e-6, rtol=1e-6)

    print("KERNEL_OK")
</pallas_src>

<mosaic_0001>
module attributes {stable_mosaic.version = 11 : i64} {
  func.func @_square_kernel(%arg0: i32, %arg1: memref<32x128xf32, #tpu.memory_space<vmem>>, %arg2: memref<32x128xf32, #tpu.memory_space<vmem>>) attributes {dimension_semantics = [#tpu.dimension_semantics<parallel>], iteration_bounds = array<i64: 1>, scalar_prefetch = 0 : i64, scratch_operands = 0 : i64, tpu.core_type = #tpu.core_type<tc>, window_params = [{transform_indices = @transform_0, window_bounds = array<i64: 32, 128>}, {transform_indices = @transform_1, window_bounds = array<i64: 32, 128>}]} {
    %c0 = arith.constant 0 : index
    %c0_0 = arith.constant 0 : index
    %0 = vector.load %arg1[%c0, %c0_0] : memref<32x128xf32, #tpu.memory_space<vmem>>, vector<32x128xf32>
    %1 = arith.mulf %0, %0 : vector<32x128xf32>
    %c0_1 = arith.constant 0 : index
    %c0_2 = arith.constant 0 : index
    %2 = vector.load %arg2[%c0_1, %c0_2] : memref<32x128xf32, #tpu.memory_space<vmem>>, vector<32x128xf32>
    tpu.vector_store %arg2[%c0_1, %c0_2], %1 {strides = array<i32>} : memref<32x128xf32, #tpu.memory_space<vmem>>, vector<32x128xf32>,
    return
  }
  func.func @transform_0(%arg0: i32) -> (i32, i32) {
    %c0_i32 = arith.constant 0 : i32
    %c0_i32_0 = arith.constant 0 : i32
    return %arg0, %c0_i32 : i32, i32
  }
  func.func @transform_1(%arg0: i32) -> (i32, i32) {
    %c0_i32 = arith.constant 0 : i32
    %c0_i32_0 = arith.constant 0 : i32
    return %arg0, %c0_i32 : i32, i32
  }
}

</mosaic_0001>

<llo_original>
// kernel: tpu_custom_call.1
$region0: #{tpu_custom_call.1}
  #allocation0 [shape = 'u32[]', space=smem, size = 0x4, offset = 0x4, fixed_abs, tag = 'smem constant byte address 0x4 - core index']
  #allocation1 [shape = 'u32[144,128]{1,0:T(1,128)}', space=vmem, size = 0x12000, scoped, tag = 'internal scratch']
  %s0 = inlined_call_operand.hbm [shape: f32[32,128], index: 0, kind: input, shape index: {}]
  %s1 = inlined_call_operand.hbm [shape: f32[32,128], index: 1, kind: output, shape index: {}]
  %s2 = sld [smem:[#allocation0]]
  $region18: #{tpu_custom_call.1} parent=0
    _
  %s4 = ssub.s32 1, %s2
  %s5 = scalar_select 0, %s4, %s2
  $region1: #{tpu_custom_call.1} parent=0
    #allocation2 [shape = 'u8[16384]{0}', space=vmem, size = 0x4000, scoped, tag = 'input window, operand 0, single buffered']
    #allocation3 [shape = 's32[1]{0}', space=sflag, size = 0x4, scoped, tag = 'scoped memory for tpu_custom_call.1']
    #allocation4 [shape = 's32[1]{0}', space=sflag, size = 0x4, scoped, tag = 'scoped memory for tpu_custom_call.1']
    #allocation5 [shape = 'u8[16384]{0}', space=vmem, size = 0x4000, scoped, tag = 'output window, operand 0, single buffered']
    %6 = vsyncpa [#allocation3], 0
    %7 = vsyncpa [#allocation4], 0
    // Predicated region
    $region2: #{tpu_custom_call.1} parent=1 // pred_check
      _
    $region3: #{tpu_custom_call.1} parent=1 // pred_check_branch
      %9 = sbr.rel (0) target = $region5
    $region4: #{tpu_custom_call.1} parent=1 // pred_region
      %s11 = ssub.s32 512, 512
      %12 = vsyncadd [#allocation3], %s11
      %s13 = sshll.u32 [#allocation2], 4
      %s14 = int_to_ptr.vmem [resolvable:$true] %s13
      %19 = dma.hbm_to_vmem [thread:$0]  %s0, 512, %s14, [#allocation3], 128, 128, 8
    $region5: #{tpu_custom_call.1} parent=1 // pred_fallthru
      _
    // Predicated region
    $region6: #{tpu_custom_call.1} parent=1 // pred_check
      _
    $region7: #{tpu_custom_call.1} parent=1 // pred_check_branch
      %21 = sbr.rel (0) target = $region9
    $region8: #{tpu_custom_call.1} parent=1 // pred_region
      %22 = dma.done [#allocation3], 512
    $region9: #{tpu_custom_call.1} parent=1 // pred_fallthru
      _
    %v23 = vld [vmem:[#allocation2] sm:$0xff]
    %v24 = vld [vmem:[#allocation2 + $0x8] sm:$0xff]
    %v25 = vld [vmem:[#allocation2 + $0x10] sm:$0xff]
    %v26 = vld [vmem:[#allocation2 + $0x18] sm:$0xff]
    %v27 = vmul.f32 %v23, %v23
    %v28 = vmul.f32 %v24, %v24
    %v29 = vmul.f32 %v25, %v25
    %v30 = vmul.f32 %v26, %v26
    %31 = vst [vmem:[#allocation5] sm:$0xff] %v27
    %32 = vst [vmem:[#allocation5 + $0x8] sm:$0xff] %v28
    %33 = vst [vmem:[#allocation5 + $0x10] sm:$0xff] %v29
    %34 = vst [vmem:[#allocation5 + $0x18] sm:$0xff] %v30
    // Predicated region
    $region10: #{tpu_custom_call.1} parent=1 // pred_check
      _
    $region11: #{tpu_custom_call.1} parent=1 // pred_check_branch
      %36 = sbr.rel (0) target = $region13
    $region12: #{tpu_custom_call.1} parent=1 // pred_region
      %s38 = ssub.s32 512, 512
      %39 = vsyncadd [#allocation4], %s38
      %s40 = sshll.u32 [#allocation5], 4
      %s41 = int_to_ptr.vmem [resolvable:$true] %s40
      %46 = dma.vmem_to_hbm [thread:$0]  %s41, 512, %s1, [#allocation4], 128, 128, 8
    $region13: #{tpu_custom_call.1} parent=1 // pred_fallthru
      _
    // Predicated region
    $region14: #{tpu_custom_call.1} parent=1 // pred_check
      _
    $region15: #{tpu_custom_call.1} parent=1 // pred_check_branch
      %48 = sbr.rel (0) target = $region17
    $region16: #{tpu_custom_call.1} parent=1 // pred_region
      %49 = dma.done [#allocation4], 512
    $region17: #{tpu_custom_call.1} parent=1 // pred_fallthru
      _
    %50 = vsyncpa [#allocation3], 1
    %51 = vsyncpa [#allocation4], 1

</llo_original>
